<compile_context>
chip_gen: v7x
topology: tpu7x:2x2x1
jax: 0.10.0
libtpu: 0.0.40
codegen_flags: <defaults>
</compile_context>

<pallas_src>
import functools

import jax
import jax.numpy as jnp
from jax.experimental import pallas as pl
from jax.experimental.pallas import tpu as pltpu


_LANE = 128     # lane width: last dim of every tile should be a multiple of this
_SUBLANE = 8    # f32 sublane granularity for row tiles


def _round_up(n, m):
    return ((n + m - 1) // m) * m


def _pick_tm(m_rows):
    """Row-tile heuristic: large tiles amortize the ~0.35us/grid-step overhead,
    but keep >= 2 grid steps when possible so both v7x TensorCores get work."""
    half = _round_up(max(1, (m_rows + 1) // 2), _SUBLANE)
    return max(_SUBLANE, min(512, half))


def _token_decoder_kernel(x_ref, w_ref, b_ref, o_ref):
    """One (tm, Cp) row tile of the 4-layer residual MLP.

    x_ref : (tm, Cp)     f32   activations (lane-padded)
    w_ref : (4, Cp, Cp)  bf16  packed weights, (C_in, C_out) layout
    b_ref : (4, 1, Cp)   f32   packed biases
    o_ref : (tm, Cp)     f32
    """
    h = x_ref[...]  # residual path stays f32 (v5e VPU has no bf16 path)

    # blocks 1..3: relu(linear_n(h) + h)
    for n in range(3):
        w = w_ref[n]
        g = jnp.dot(h.astype(w.dtype), w, preferred_element_type=jnp.float32)
        h = jnp.maximum(g + b_ref[n] + h, 0.0)

    # final: linear4(h)  (no residual, no relu)
    w = w_ref[3]
    y = jnp.dot(h.astype(w.dtype), w, preferred_element_type=jnp.float32) + b_ref[3]
    o_ref[...] = y.astype(o_ref.dtype)


@functools.partial(jax.jit, static_argnames=("tm", "weight_dtype"))
def token_decoder(x, params, *, tm=None, weight_dtype=jnp.bfloat16):
    """x: (B, P, C) float32. params: w1..w4 as (C_in, C_out), b1..b4 as (1, C)."""
    B, P, C = x.shape
    M = B * P
    Cp = _round_up(C, _LANE)
    if tm is None:
        tm = _pick_tm(M)
    M_pad = _round_up(M, tm)
    grid = (M_pad // tm,)

    # --- pack + lane-pad parameters (zero padding => padded lanes stay 0) ---
    def pad_w(w):
        return jnp.pad(w, ((0, Cp - C), (0, Cp - C)))

    def pad_b(b):
        return jnp.pad(b.reshape(1, C), ((0, 0), (0, Cp - C)))

    w_packed = jnp.stack(
        [pad_w(params[f"w{n}"]) for n in range(1, 5)]
    ).astype(weight_dtype)                                   # (4, Cp, Cp)
    b_packed = jnp.stack(
        [pad_b(params[f"b{n}"]) for n in range(1, 5)]
    ).astype(jnp.float32)                                    # (4, 1, Cp)

    # --- rows flattened + padded to the row tile; channels lane-padded ------
    # Row padding only copies when M % tm != 0 (acceptable for small M; zero
    # rows pass harmlessly through the chain and are sliced off below).
    x2d = x.reshape(M, C)
    x2d = jnp.pad(x2d, ((0, M_pad - M), (0, Cp - C)))

    row_spec = pl.BlockSpec((tm, Cp), lambda i: (i, 0))
    w_spec = pl.BlockSpec((4, Cp, Cp), lambda i: (0, 0, 0))   # resident, constant index
    b_spec = pl.BlockSpec((4, 1, Cp), lambda i: (0, 0, 0))

    # Resident VMEM estimate: packed weights + biases + double-buffered
    # in/out row tiles. Only raise the scoped limit when actually needed
    # (v5e default 16 MiB, v6e/v7x 32 MiB).
    weight_bytes = 4 * Cp * Cp * jnp.dtype(weight_dtype).itemsize
    est_bytes = weight_bytes + 4 * Cp * 4 + 2 * 2 * tm * Cp * 4
    vmem_limit = None
    if est_bytes > (16 << 20):
        vmem_limit = min(int(est_bytes * 1.25) + (2 << 20), 112 << 20)

    out2d = pl.pallas_call(
        _token_decoder_kernel,
        out_shape=jax.ShapeDtypeStruct((M_pad, Cp), x.dtype),
        grid_spec=pltpu.PrefetchScalarGridSpec(
            num_scalar_prefetch=0,
            grid=grid,
            in_specs=[row_spec, w_spec, b_spec],
            out_specs=row_spec,
        ),
        compiler_params=pltpu.CompilerParams(
            dimension_semantics=("parallel",),
            vmem_limit_bytes=vmem_limit,
        ),
    )(x2d, w_packed, b_packed)

    return out2d[:M, :C].reshape(B, P, C)


def token_decoder_ref(x, params, weight_dtype=jnp.float32):
    """Pure-JAX reference of the PyTorch forward (use_norm=False).

    With weight_dtype=bf16 it mirrors the kernel's precision (bf16 operands,
    f32 accumulation, f32 residual path)."""
    def layer(h, w, b):
        return (
            jnp.dot(
                h.astype(weight_dtype),
                w.astype(weight_dtype),
                preferred_element_type=jnp.float32,
            )
            + b
        )

    h = jnp.maximum(layer(x, params["w1"], params["b1"]) + x, 0.0)
    h = jnp.maximum(layer(h, params["w2"], params["b2"]) + h, 0.0)
    h = jnp.maximum(layer(h, params["w3"], params["b3"]) + h, 0.0)
    return layer(h, params["w4"], params["b4"])


def init_params(key, C):
    """Deterministic synthetic weights. Stored as (C_in, C_out) + (1, C)."""
    keys = jax.random.split(key, 8)
    scale = 1.0 / jnp.sqrt(C)
    params = {}
    for n in range(4):
        params[f"w{n + 1}"] = jax.random.uniform(
            keys[2 * n], (C, C), jnp.float32, minval=-scale, maxval=scale
        )
        params[f"b{n + 1}"] = jax.random.uniform(
            keys[2 * n + 1], (1, C), jnp.float32, minval=-scale, maxval=scale
        )
    return params


if __name__ == "__main__":
    # Small shapes: batch=2, tokens(P)=8, transformer_embedding_dim=32.
    B, P, C = 2, 8, 32
    key = jax.random.PRNGKey(0)
    kx, kp = jax.random.split(key)

    x = jax.random.normal(kx, (B, P, C), dtype=jnp.float32)
    params = init_params(kp, C)

    out = token_decoder(x, params)
    out = jax.block_until_ready(out)
    assert out.shape == (B, P, C), out.shape

    # Tight check against a matched-precision reference (bf16 weights/operands,
    # f32 accumulation) — verifies the kernel itself.
    ref_bf16 = token_decoder_ref(x, params, weight_dtype=jnp.bfloat16)
    err_bf16 = float(jnp.max(jnp.abs(out - ref_bf16)))
    assert jnp.allclose(out, ref_bf16, atol=2e-3, rtol=2e-3), err_bf16

    # Loose semantic check against the full-f32 PyTorch-equivalent forward —
    # difference is only bf16 weight/activation quantization.
    ref_f32 = token_decoder_ref(x, params, weight_dtype=jnp.float32)
    err_f32 = float(jnp.max(jnp.abs(out - ref_f32)))
    assert jnp.allclose(out, ref_f32, atol=1e-1, rtol=1e-1), err_f32

    print("KERNEL_OK")
</pallas_src>

<mosaic_0001>
module attributes {stable_mosaic.version = 11 : i64} {
  func.func @_token_decoder_kernel(%arg0: i32, %arg1: memref<8x128xf32, #tpu.memory_space<vmem>>, %arg2: memref<4x128x128xbf16, #tpu.memory_space<vmem>>, %arg3: memref<4x1x128xf32, #tpu.memory_space<vmem>>, %arg4: memref<8x128xf32, #tpu.memory_space<vmem>>) attributes {dimension_semantics = [#tpu.dimension_semantics<parallel>], iteration_bounds = array<i64: 2>, scalar_prefetch = 0 : i64, scratch_operands = 0 : i64, tpu.core_type = #tpu.core_type<tc>, window_params = [{transform_indices = @transform_0, window_bounds = array<i64: 8, 128>}, {pipeline_mode = #tpu.pipeline_mode<synchronous>, transform_indices = @transform_1, window_bounds = array<i64: 4, 128, 128>}, {pipeline_mode = #tpu.pipeline_mode<synchronous>, transform_indices = @transform_2, window_bounds = array<i64: 4, 1, 128>}, {transform_indices = @transform_3, window_bounds = array<i64: 8, 128>}]} {
    %c0 = arith.constant 0 : index
    %c0_0 = arith.constant 0 : index
    %0 = vector.load %arg1[%c0, %c0_0] : memref<8x128xf32, #tpu.memory_space<vmem>>, vector<8x128xf32>
    %c0_1 = arith.constant 0 : index
    %c0_2 = arith.constant 0 : index
    %c0_3 = arith.constant 0 : index
    %1 = vector.load %arg2[%c0_1, %c0_2, %c0_3] : memref<4x128x128xbf16, #tpu.memory_space<vmem>>, vector<1x128x128xbf16>
    %2 = vector.shape_cast %1 : vector<1x128x128xbf16> to vector<128x128xbf16>
    %3 = arith.truncf %0 : vector<8x128xf32> to vector<8x128xbf16>
    %cst = arith.constant dense<0.000000e+00> : vector<8x128xf32>
    %4 = tpu.matmul %3, %2, %cst {dimension_numbers = #tpu.dot_dimension_numbers<[1], [0], [0], [1], [0, 0, 1, 1], [], []>} : vector<8x128xbf16>, vector<128x128xbf16>, vector<8x128xf32> -> vector<8x128xf32>
    %c0_4 = arith.constant 0 : index
    %c0_5 = arith.constant 0 : index
    %c0_6 = arith.constant 0 : index
    %5 = vector.load %arg3[%c0_4, %c0_5, %c0_6] : memref<4x1x128xf32, #tpu.memory_space<vmem>>, vector<1x1x128xf32>
    %6 = vector.shape_cast %5 : vector<1x1x128xf32> to vector<1x128xf32>
    %7 = vector.broadcast %6 : vector<1x128xf32> to vector<8x128xf32>
    %8 = arith.addf %4, %7 : vector<8x128xf32>
    %9 = arith.addf %8, %0 : vector<8x128xf32>
    %cst_7 = arith.constant 0.000000e+00 : f32
    %10 = vector.broadcast %cst_7 : f32 to vector<8x128xf32>
    %11 = arith.maximumf %9, %10 : vector<8x128xf32>
    %c1 = arith.constant 1 : index
    %c0_8 = arith.constant 0 : index
    %c0_9 = arith.constant 0 : index
    %12 = vector.load %arg2[%c1, %c0_8, %c0_9] : memref<4x128x128xbf16, #tpu.memory_space<vmem>>, vector<1x128x128xbf16>
    %13 = vector.shape_cast %12 : vector<1x128x128xbf16> to vector<128x128xbf16>
    %14 = arith.truncf %11 : vector<8x128xf32> to vector<8x128xbf16>
    %cst_10 = arith.constant dense<0.000000e+00> : vector<8x128xf32>
    %15 = tpu.matmul %14, %13, %cst_10 {dimension_numbers = #tpu.dot_dimension_numbers<[1], [0], [0], [1], [0, 0, 1, 1], [], []>} : vector<8x128xbf16>, vector<128x128xbf16>, vector<8x128xf32> -> vector<8x128xf32>
    %c1_11 = arith.constant 1 : index
    %c0_12 = arith.constant 0 : index
    %c0_13 = arith.constant 0 : index
    %16 = vector.load %arg3[%c1_11, %c0_12, %c0_13] : memref<4x1x128xf32, #tpu.memory_space<vmem>>, vector<1x1x128xf32>
    %17 = vector.shape_cast %16 : vector<1x1x128xf32> to vector<1x128xf32>
    %18 = vector.broadcast %17 : vector<1x128xf32> to vector<8x128xf32>
    %19 = arith.addf %15, %18 : vector<8x128xf32>
    %20 = arith.addf %19, %11 : vector<8x128xf32>
    %cst_14 = arith.constant 0.000000e+00 : f32
    %21 = vector.broadcast %cst_14 : f32 to vector<8x128xf32>
    %22 = arith.maximumf %20, %21 : vector<8x128xf32>
    %c2 = arith.constant 2 : index
    %c0_15 = arith.constant 0 : index
    %c0_16 = arith.constant 0 : index
    %23 = vector.load %arg2[%c2, %c0_15, %c0_16] : memref<4x128x128xbf16, #tpu.memory_space<vmem>>, vector<1x128x128xbf16>
    %24 = vector.shape_cast %23 : vector<1x128x128xbf16> to vector<128x128xbf16>
    %25 = arith.truncf %22 : vector<8x128xf32> to vector<8x128xbf16>
    %cst_17 = arith.constant dense<0.000000e+00> : vector<8x128xf32>
    %26 = tpu.matmul %25, %24, %cst_17 {dimension_numbers = #tpu.dot_dimension_numbers<[1], [0], [0], [1], [0, 0, 1, 1], [], []>} : vector<8x128xbf16>, vector<128x128xbf16>, vector<8x128xf32> -> vector<8x128xf32>
    %c2_18 = arith.constant 2 : index
    %c0_19 = arith.constant 0 : index
    %c0_20 = arith.constant 0 : index
    %27 = vector.load %arg3[%c2_18, %c0_19, %c0_20] : memref<4x1x128xf32, #tpu.memory_space<vmem>>, vector<1x1x128xf32>
    %28 = vector.shape_cast %27 : vector<1x1x128xf32> to vector<1x128xf32>
    %29 = vector.broadcast %28 : vector<1x128xf32> to vector<8x128xf32>
    %30 = arith.addf %26, %29 : vector<8x128xf32>
    %31 = arith.addf %30, %22 : vector<8x128xf32>
    %cst_21 = arith.constant 0.000000e+00 : f32
    %32 = vector.broadcast %cst_21 : f32 to vector<8x128xf32>
    %33 = arith.maximumf %31, %32 : vector<8x128xf32>
    %c3 = arith.constant 3 : index
    %c0_22 = arith.constant 0 : index
    %c0_23 = arith.constant 0 : index
    %34 = vector.load %arg2[%c3, %c0_22, %c0_23] : memref<4x128x128xbf16, #tpu.memory_space<vmem>>, vector<1x128x128xbf16>
    %35 = vector.shape_cast %34 : vector<1x128x128xbf16> to vector<128x128xbf16>
    %36 = arith.truncf %33 : vector<8x128xf32> to vector<8x128xbf16>
    %cst_24 = arith.constant dense<0.000000e+00> : vector<8x128xf32>
    %37 = tpu.matmul %36, %35, %cst_24 {dimension_numbers = #tpu.dot_dimension_numbers<[1], [0], [0], [1], [0, 0, 1, 1], [], []>} : vector<8x128xbf16>, vector<128x128xbf16>, vector<8x128xf32> -> vector<8x128xf32>
    %c3_25 = arith.constant 3 : index
    %c0_26 = arith.constant 0 : index
    %c0_27 = arith.constant 0 : index
    %38 = vector.load %arg3[%c3_25, %c0_26, %c0_27] : memref<4x1x128xf32, #tpu.memory_space<vmem>>, vector<1x1x128xf32>
    %39 = vector.shape_cast %38 : vector<1x1x128xf32> to vector<1x128xf32>
    %40 = vector.broadcast %39 : vector<1x128xf32> to vector<8x128xf32>
    %41 = arith.addf %37, %40 : vector<8x128xf32>
    %c0_28 = arith.constant 0 : index
    %c0_29 = arith.constant 0 : index
    %42 = vector.load %arg4[%c0_28, %c0_29] : memref<8x128xf32, #tpu.memory_space<vmem>>, vector<8x128xf32>
    tpu.vector_store %arg4[%c0_28, %c0_29], %41 {strides = array<i32>} : memref<8x128xf32, #tpu.memory_space<vmem>>, vector<8x128xf32>,
    return
  }
  func.func @transform_0(%arg0: i32) -> (i32, i32) {
    %c0_i32 = arith.constant 0 : i32
    %c0_i32_0 = arith.constant 0 : i32
    return %arg0, %c0_i32 : i32, i32
  }
  func.func @transform_1(%arg0: i32) -> (i32, i32, i32) {
    %c0_i32 = arith.constant 0 : i32
    %c0_i32_0 = arith.constant 0 : i32
    %c0_i32_1 = arith.constant 0 : i32
    %c0_i32_2 = arith.constant 0 : i32
    return %c0_i32, %c0_i32_0, %c0_i32_1 : i32, i32, i32
  }
  func.func @transform_2(%arg0: i32) -> (i32, i32, i32) {
    %c0_i32 = arith.constant 0 : i32
    %c0_i32_0 = arith.constant 0 : i32
    %c0_i32_1 = arith.constant 0 : i32
    %c0_i32_2 = arith.constant 0 : i32
    return %c0_i32, %c0_i32_0, %c0_i32_1 : i32, i32, i32
  }
  func.func @transform_3(%arg0: i32) -> (i32, i32) {
    %c0_i32 = arith.constant 0 : i32
    %c0_i32_0 = arith.constant 0 : i32
    return %arg0, %c0_i32 : i32, i32
  }
}

</mosaic_0001>

<llo_original>
// kernel: token_decoder.1
$region0: #{token_decoder.1}
  #allocation0 [shape = 'u32[]', space=smem, size = 0x4, offset = 0x4, fixed_abs, tag = 'smem constant byte address 0x4 - core index']
  #allocation1 [shape = 'u32[144,128]{1,0:T(1,128)}', space=vmem, size = 0x12000, scoped, tag = 'internal scratch']
  %s0 = inlined_call_operand.vmem [shape: f32[16,128], index: 0, kind: input, shape index: {}]
  %s1 = inlined_call_operand.vmem [shape: bf16[4,128,128], index: 1, kind: input, shape index: {}]
  %s2 = inlined_call_operand.vmem [shape: f32[4,1,128], index: 2, kind: input, shape index: {}]
  %s3 = inlined_call_operand.vmem [shape: f32[16,128], index: 3, kind: output, shape index: {}]
  %s4 = sld [smem:[#allocation0]]
  $region45: #{token_decoder.1} parent=0
    _
  %s6 = ssub.s32 1, %s4
  %s7 = scalar_select 0, %s6, %s4
  loop: start=0, step=1, limit=4
  $region2: #{token_decoder.1} parent=0 // loop_pre_header
    _
  $region3: #{token_decoder.1} parent=0 // loop_header
    %s9 = sphi 0, %s13
    %p10 = scmp.ge.s32.totalorder %s9, 4
    %s19 = sphi 0, %s21
    %s22 = sphi 0, %s19
    %s23 = sphi 0, %s22
    %s39 = sphi 0, %s23
    %s43 = sphi 0, %s43
    %s45 = sphi 0, %s43
    %s46 = sphi 0, %s45
    %s60 = sphi 0, %s46
    %s64 = sphi 0, %s64
    %s66 = sphi 0, %s64
    %s67 = sphi 0, %s66
    %s81 = sphi 0, %s67
    %s87 = sphi 0, %s89
    %s90 = sphi 0, %s87
    %s91 = sphi 0, %s90
    %s107 = sphi 0, %s91
  $region4: #{token_decoder.1} parent=0 // loop_header_branch
    %12 = sbr.rel (%p10) target = $region8
  $region5: #{token_decoder.1} parent=0 // loop_body
    %s14 = ssub.s32 %s9, 1
    %s15 = ssub.s32 %s9, 2
    %s16 = sadd.s32 %s9, 1
    %s17 = ssub.s32 %s9, %s16
    %p18 = scmp.eq.s32.totalorder %s17, 0
    %s20 = sadd.s32 %s19, 1
    %s21 = scalar_select %p18, %s19, %s20
    %p24 = pneg %p18
    %p25 = scmp.eq.s32.totalorder %s9, 1
    %p26 = por %p24, %p25
    %p27 = scmp.ne.s32.totalorder %s19, %s22
    %p28 = scmp.eq.s32.totalorder %s9, 0
    %p29 = por %p27, %p28
    %p30 = scmp.ne.s32.totalorder %s19, %s22
    %p31 = scmp.eq.s32.totalorder %s14, 1
    %p32 = por %p30, %p31
    %p33 = scmp.ne.s32.totalorder %s22, %s23
    %p34 = scmp.eq.s32.totalorder %s14, 0
    %p35 = por %p33, %p34
    %p36 = scmp.ne.s32.totalorder %s22, %s23
    %p37 = scmp.eq.s32.totalorder %s15, 1
    %p38 = por %p36, %p37
    %p40 = scmp.ne.s32.totalorder %s23, %s39
    %p41 = scmp.eq.s32.totalorder %s15, 0
    %p42 = por %p40, %p41
    %s44 = sadd.s32 %s43, 1
    %p47 = scmp.eq.s32.totalorder %s9, 1
    %p48 = scmp.ne.s32.totalorder %s43, %s45
    %p49 = scmp.eq.s32.totalorder %s9, 0
    %p50 = por %p48, %p49
    %p51 = scmp.ne.s32.totalorder %s43, %s45
    %p52 = scmp.eq.s32.totalorder %s14, 1
    %p53 = por %p51, %p52
    %p54 = scmp.ne.s32.totalorder %s45, %s46
    %p55 = scmp.eq.s32.totalorder %s14, 0
    %p56 = por %p54, %p55
    %p57 = scmp.ne.s32.totalorder %s45, %s46
    %p58 = scmp.eq.s32.totalorder %s15, 1
    %p59 = por %p57, %p58
    %p61 = scmp.ne.s32.totalorder %s46, %s60
    %p62 = scmp.eq.s32.totalorder %s15, 0
    %p63 = por %p61, %p62
    %s65 = sadd.s32 %s64, 1
    %p68 = scmp.eq.s32.totalorder %s9, 1
    %p69 = scmp.ne.s32.totalorder %s64, %s66
    %p70 = scmp.eq.s32.totalorder %s9, 0
    %p71 = por %p69, %p70
    %p72 = scmp.ne.s32.totalorder %s64, %s66
    %p73 = scmp.eq.s32.totalorder %s14, 1
    %p74 = por %p72, %p73
    %p75 = scmp.ne.s32.totalorder %s66, %s67
    %p76 = scmp.eq.s32.totalorder %s14, 0
    %p77 = por %p75, %p76
    %p78 = scmp.ne.s32.totalorder %s66, %s67
    %p79 = scmp.eq.s32.totalorder %s15, 1
    %p80 = por %p78, %p79
    %p82 = scmp.ne.s32.totalorder %s67, %s81
    %p83 = scmp.eq.s32.totalorder %s15, 0
    %p84 = por %p82, %p83
    %s85 = ssub.s32 %s9, %s16
    %p86 = scmp.eq.s32.totalorder %s85, 0
    %s88 = sadd.s32 %s87, 1
    %s89 = scalar_select %p86, %s87, %s88
    %p92 = pneg %p86
    %p93 = scmp.eq.s32.totalorder %s9, 1
    %p94 = por %p92, %p93
    %p95 = scmp.ne.s32.totalorder %s87, %s90
    %p96 = scmp.eq.s32.totalorder %s9, 0
    %p97 = por %p95, %p96
    %p98 = scmp.ne.s32.totalorder %s87, %s90
    %p99 = scmp.eq.s32.totalorder %s14, 1
    %p100 = por %p98, %p99
    %p101 = scmp.ne.s32.totalorder %s90, %s91
    %p102 = scmp.eq.s32.totalorder %s14, 0
    %p103 = por %p101, %p102
    %p104 = scmp.ne.s32.totalorder %s90, %s91
    %p105 = scmp.eq.s32.totalorder %s15, 1
    %p106 = por %p104, %p105
    %p108 = scmp.ne.s32.totalorder %s91, %s107
    %p109 = scmp.eq.s32.totalorder %s15, 0
    %p110 = por %p108, %p109
    %p111 = scmp.le.s32.totalorder 1, %s9
    %p112 = scmp.lt.s32.totalorder %s9, 3
    %p113 = pnand %p111, %p112
    %p114 = pneg %p113
    // Predicated region
    $region9: #{token_decoder.1} parent=5 // pred_check
      _
    $region10: #{token_decoder.1} parent=5 // pred_check_branch
      %116 = sbr.rel (%p113) target = $region12
    $region11: #{token_decoder.1} parent=5 // pred_region
      %s117 = ssub.s32 %s9, 1
      // Predicated region
      $region13: #{token_decoder.1} parent=11 // pred_check
        %p118 = pneg %p56
      $region14: #{token_decoder.1} parent=11 // pred_check_branch
        %120 = sbr.rel (%p118) target = $region16
      $region15: #{token_decoder.1} parent=11 // pred_region
        _
      $region16: #{token_decoder.1} parent=11 // pred_fallthru
        _
      // Predicated region
      $region17: #{token_decoder.1} parent=11 // pred_check
        %p121 = pneg %p77
      $region18: #{token_decoder.1} parent=11 // pred_check_branch
        %123 = sbr.rel (%p121) target = $region20
      $region19: #{token_decoder.1} parent=11 // pred_region
        _
      $region20: #{token_decoder.1} parent=11 // pred_fallthru
        _
    $region12: #{token_decoder.1} parent=5 // pred_fallthru
      _
    %p124 = scmp.lt.s32.totalorder %s9, 2
    // Predicated region
    $region21: #{token_decoder.1} parent=5 // pred_check
      %p125 = pneg %p124
    $region22: #{token_decoder.1} parent=5 // pred_check_branch
      %127 = sbr.rel (%p125) target = $region24
    $region23: #{token_decoder.1} parent=5 // pred_region
      // Predicated region
      $region25: #{token_decoder.1} parent=23 // pred_check
        %p128 = pneg %p29
      $region26: #{token_decoder.1} parent=23 // pred_check_branch
        %130 = sbr.rel (%p128) target = $region28
      $region27: #{token_decoder.1} parent=23 // pred_region
        %p131 = scmp.lt.s32.totalorder %s9, 1
        %s132 = scalar_select %p131, %s9, 1
        %s133 = smul.addr %s132, 8
        %s134 = scalar_lea.vmem %s0, %s133
      $region28: #{token_decoder.1} parent=23 // pred_fallthru
        _
    $region24: #{token_decoder.1} parent=5 // pred_fallthru
      _
    %p135 = scmp.le.s32.totalorder 1, %s9
    %p136 = scmp.lt.s32.totalorder %s9, 3
    %p137 = pnand %p135, %p136
    %p138 = pneg %p137
    // Predicated region
    $region29: #{token_decoder.1} parent=5 // pred_check
      _
    $region30: #{token_decoder.1} parent=5 // pred_check_branch
      %140 = sbr.rel (%p137) target = $region32
    $region31: #{token_decoder.1} parent=5 // pred_region
      %s141 = ssub.s32 %s9, 1
      %p142 = scmp.lt.s32.totalorder %s14, 1
      %s143 = scalar_select %p142, %s14, 1
      %s144 = smul.addr %s143, 8
      %s145 = scalar_lea.vmem %s0, %s144
      %p146 = pneg %p35
      %p147 = pneg %p32
      %p148 = pneg %p56
      %p149 = pneg %p53
      %p150 = pneg %p77
      %p151 = pneg %p74
      %p152 = pneg %p103
      %p153 = pneg %p100
      %p154 = scmp.lt.s32.totalorder %s14, 1
      %s155 = scalar_select %p154, %s14, 1
      %s156 = smul.addr %s155, 8
      %s157 = scalar_lea.vmem %s3, %s156
      %p158 = scmp.lt.s32.totalorder %s14, 1
      %s159 = scalar_select %p158, %s14, 1
      %s160 = smul.addr %s159, 8
      %s161 = scalar_lea.vmem %s0, %s160
      %p162 = scmp.lt.s32.totalorder %s14, 1
      %s163 = scalar_select %p162, %s14, 1
      %s164 = smul.addr %s163, 8
      %s165 = scalar_lea.vmem %s3, %s164
      %v167 = vld [vmem:[%s161] sm:$0xff]
      %v168 = vld [vmem:[%s1] sm:$0xf]
      %v169 = vld [vmem:[%s1 + $0x4] sm:$0xf]
      %v170 = vld [vmem:[%s1 + $0x8] sm:$0xf]
      %v171 = vld [vmem:[%s1 + $0xc] sm:$0xf]
      %v172 = vld [vmem:[%s1 + $0x10] sm:$0xf]
      %v173 = vld [vmem:[%s1 + $0x14] sm:$0xf]
      %v174 = vld [vmem:[%s1 + $0x18] sm:$0xf]
      %v175 = vld [vmem:[%s1 + $0x1c] sm:$0xf]
      %v176 = vld [vmem:[%s1 + $0x20] sm:$0xf]
      %v177 = vld [vmem:[%s1 + $0x24] sm:$0xf]
      %v178 = vld [vmem:[%s1 + $0x28] sm:$0xf]
      %v179 = vld [vmem:[%s1 + $0x2c] sm:$0xf]
      %v180 = vld [vmem:[%s1 + $0x30] sm:$0xf]
      %v181 = vld [vmem:[%s1 + $0x34] sm:$0xf]
      %v182 = vld [vmem:[%s1 + $0x38] sm:$0xf]
      %v183 = vld [vmem:[%s1 + $0x3c] sm:$0xf]
      %v184 = vpack.c.bf16 %v167, %v167
      %v185 = vld [vmem:[%s2] sm:$0x1]
      %v187 = vlaneseq
      %v188 = vshrl.u32 %v187, 7
      %v189 = vsub.s32 0, %v188
      %v190 = vrot.slane %v185, %v189
      %v208 = vunpack.c.l.b16 %v168
      %v209 = vunpack.c.l.b16 %v169
      %v210 = vunpack.c.l.b16 %v170
      %v211 = vunpack.c.l.b16 %v171
      %v212 = vunpack.c.l.b16 %v172
      %v213 = vunpack.c.l.b16 %v173
      %v214 = vunpack.c.l.b16 %v174
      %v215 = vunpack.c.l.b16 %v175
      %v216 = vunpack.c.l.b16 %v176
      %v217 = vunpack.c.l.b16 %v177
      %v218 = vunpack.c.l.b16 %v178
      %v219 = vunpack.c.l.b16 %v179
      %v220 = vunpack.c.l.b16 %v180
      %v221 = vunpack.c.l.b16 %v181
      %v222 = vunpack.c.l.b16 %v182
      %v223 = vunpack.c.l.b16 %v183
      %v224 = vpack.c.b16 %v209, %v208
      %v225 = vpack.c.b16 %v211, %v210
      %v226 = vpack.c.b16 %v213, %v212
      %v227 = vpack.c.b16 %v215, %v214
      %v228 = vpack.c.b16 %v217, %v216
      %v229 = vpack.c.b16 %v219, %v218
      %v230 = vpack.c.b16 %v221, %v220
      %v231 = vpack.c.b16 %v223, %v222
      %240 = vmatprep.subr.bf16.mxu0 0
      %241 = vmatpush1.bf16.msra.mxu0 %v224
      %242 = vmatprep.subr.bf16.mxu0 0
      %243 = vmatpush1.bf16.msra.mxu0 %v225
      %244 = vmatprep.subr.bf16.mxu0 0
      %245 = vmatpush1.bf16.msra.mxu0 %v226
      %246 = vmatprep.subr.bf16.mxu0 0
      %247 = vmatpush1.bf16.msra.mxu0 %v227
      %248 = vmatprep.subr.bf16.mxu0 0
      %249 = vmatpush1.bf16.msra.mxu0 %v228
      %250 = vmatprep.subr.bf16.mxu0 0
      %251 = vmatpush1.bf16.msra.mxu0 %v229
      %252 = vmatprep.subr.bf16.mxu0 0
      %253 = vmatpush1.bf16.msra.mxu0 %v230
      %254 = vmatprep.subr.bf16.mxu0 0
      %255 = vmatpush1.bf16.msra.mxu0 %v231
      %256 = vmatprep.subr.bf16.mxu0 0
      %257 = vmatpush1.bf16.msra.mxu0 0
      %258 = vmatprep.subr.bf16.mxu0 0
      %259 = vmatpush1.bf16.msra.mxu0 0
      %260 = vmatprep.subr.bf16.mxu0 0
      %261 = vmatpush1.bf16.msra.mxu0 0
      %262 = vmatprep.subr.bf16.mxu0 0
      %263 = vmatpush1.bf16.msra.mxu0 0
      %264 = vmatprep.subr.bf16.mxu0 0
      %265 = vmatpush1.bf16.msra.mxu0 0
      %266 = vmatprep.subr.bf16.mxu0 0
      %267 = vmatpush1.bf16.msra.mxu0 0
      %268 = vmatprep.subr.bf16.mxu0 0
      %269 = vmatpush1.bf16.msra.mxu0 0
      %270 = vmatprep.subr.bf16.mxu0 0
      %271 = vmatpush1.bf16.msra.mxu0 0
      %272 = vmatprep.mubr.bf16.mxu0 0
      %273 = vmatmul.mubr.bf16.gmra.mrb[0].mxu0 %v184
      %v274 = vpop.f32.mrb[0].mxu0
      %v275 = vadd.f32 %v190, %v274
      %v276 = vpop.f32.mrb[0].mxu0
      %v277 = vpop.f32.mrb[0].mxu0
      %v278 = vpop.f32.mrb[0].mxu0
      %279 = vdwg.mxu0
      %v280 = vadd.f32 %v275, %v167
      %v281 = vmax.f32 %v280, 0.0
      %s282 = scalar_lea.vmem %s1, 64
      %v283 = vld [vmem:[%s282] sm:$0xf]
      %v284 = vld [vmem:[%s282 + $0x4] sm:$0xf]
      %v285 = vld [vmem:[%s282 + $0x8] sm:$0xf]
      %v286 = vld [vmem:[%s282 + $0xc] sm:$0xf]
      %v287 = vld [vmem:[%s282 + $0x10] sm:$0xf]
      %v288 = vld [vmem:[%s282 + $0x14] sm:$0xf]
      %v289 = vld [vmem:[%s282 + $0x18] sm:$0xf]
      %v290 = vld [vmem:[%s282 + $0x1c] sm:$0xf]
      %v291 = vld [vmem:[%s282 + $0x20] sm:$0xf]
      %v292 = vld [vmem:[%s282 + $0x24] sm:$0xf]
      %v293 = vld [vmem:[%s282 + $0x28] sm:$0xf]
      %v294 = vld [vmem:[%s282 + $0x2c] sm:$0xf]
      %v295 = vld [vmem:[%s282 + $0x30] sm:$0xf]
      %v296 = vld [vmem:[%s282 + $0x34] sm:$0xf]
      %v297 = vld [vmem:[%s282 + $0x38] sm:$0xf]
      %v298 = vld [vmem:[%s282 + $0x3c] sm:$0xf]
      %v299 = vpack.c.bf16 %v281, %v281
      %s300 = scalar_lea.vmem %s2, 1
      %v301 = vld [vmem:[%s300] sm:$0x1]
      %v303 = vlaneseq
      %v304 = vshrl.u32 %v303, 7
      %v305 = vsub.s32 0, %v304
      %v306 = vrot.slane %v301, %v305
      %v324 = vunpack.c.l.b16 %v283
      %v325 = vunpack.c.l.b16 %v284
      %v326 = vunpack.c.l.b16 %v285
      %v327 = vunpack.c.l.b16 %v286
      %v328 = vunpack.c.l.b16 %v287
      %v329 = vunpack.c.l.b16 %v288
      %v330 = vunpack.c.l.b16 %v289
      %v331 = vunpack.c.l.b16 %v290
      %v332 = vunpack.c.l.b16 %v291
      %v333 = vunpack.c.l.b16 %v292
      %v334 = vunpack.c.l.b16 %v293
      %v335 = vunpack.c.l.b16 %v294
      %v336 = vunpack.c.l.b16 %v295
      %v337 = vunpack.c.l.b16 %v296
      %v338 = vunpack.c.l.b16 %v297
      %v339 = vunpack.c.l.b16 %v298
      %v340 = vpack.c.b16 %v325, %v324
      %v341 = vpack.c.b16 %v327, %v326
      %v342 = vpack.c.b16 %v329, %v328
      %v343 = vpack.c.b16 %v331, %v330
      %v344 = vpack.c.b16 %v333, %v332
      %v345 = vpack.c.b16 %v335, %v334
      %v346 = vpack.c.b16 %v337, %v336
      %v347 = vpack.c.b16 %v339, %v338
      %356 = vmatprep.subr.bf16.mxu0 0
      %357 = vmatpush1.bf16.msra.mxu0 %v340
      %358 = vmatprep.subr.bf16.mxu0 0
      %359 = vmatpush1.bf16.msra.mxu0 %v341
      %360 = vmatprep.subr.bf16.mxu0 0
      %361 = vmatpush1.bf16.msra.mxu0 %v342
      %362 = vmatprep.subr.bf16.mxu0 0
      %363 = vmatpush1.bf16.msra.mxu0 %v343
      %364 = vmatprep.subr.bf16.mxu0 0
      %365 = vmatpush1.bf16.msra.mxu0 %v344
      %366 = vmatprep.subr.bf16.mxu0 0
      %367 = vmatpush1.bf16.msra.mxu0 %v345
      %368 = vmatprep.subr.bf16.mxu0 0
      %369 = vmatpush1.bf16.msra.mxu0 %v346
      %370 = vmatprep.subr.bf16.mxu0 0
      %371 = vmatpush1.bf16.msra.mxu0 %v347
      %372 = vmatprep.subr.bf16.mxu0 0
      %373 = vmatpush1.bf16.msra.mxu0 0
      %374 = vmatprep.subr.bf16.mxu0 0
      %375 = vmatpush1.bf16.msra.mxu0 0
      %376 = vmatprep.subr.bf16.mxu0 0
      %377 = vmatpush1.bf16.msra.mxu0 0
      %378 = vmatprep.subr.bf16.mxu0 0
      %379 = vmatpush1.bf16.msra.mxu0 0
      %380 = vmatprep.subr.bf16.mxu0 0
      %381 = vmatpush1.bf16.msra.mxu0 0
      %382 = vmatprep.subr.bf16.mxu0 0
      %383 = vmatpush1.bf16.msra.mxu0 0
      %384 = vmatprep.subr.bf16.mxu0 0
      %385 = vmatpush1.bf16.msra.mxu0 0
      %386 = vmatprep.subr.bf16.mxu0 0
      %387 = vmatpush1.bf16.msra.mxu0 0
      %388 = vmatprep.mubr.bf16.mxu0 0
      %389 = vmatmul.mubr.bf16.gmra.mrb[0].mxu0 %v299
      %v390 = vpop.f32.mrb[0].mxu0
      %v391 = vadd.f32 %v306, %v390
      %v392 = vpop.f32.mrb[0].mxu0
      %v393 = vpop.f32.mrb[0].mxu0
      %v394 = vpop.f32.mrb[0].mxu0
      %395 = vdwg.mxu0
      %v396 = vadd.f32 %v391, %v281
      %v397 = vmax.f32 %v396, 0.0
      %s398 = scalar_lea.vmem %s1, 128
      %v399 = vld [vmem:[%s398] sm:$0xf]
      %v400 = vld [vmem:[%s398 + $0x4] sm:$0xf]
      %v401 = vld [vmem:[%s398 + $0x8] sm:$0xf]
      %v402 = vld [vmem:[%s398 + $0xc] sm:$0xf]
      %v403 = vld [vmem:[%s398 + $0x10] sm:$0xf]
      %v404 = vld [vmem:[%s398 + $0x14] sm:$0xf]
      %v405 = vld [vmem:[%s398 + $0x18] sm:$0xf]
      %v406 = vld [vmem:[%s398 + $0x1c] sm:$0xf]
      %v407 = vld [vmem:[%s398 + $0x20] sm:$0xf]
      %v408 = vld [vmem:[%s398 + $0x24] sm:$0xf]
      %v409 = vld [vmem:[%s398 + $0x28] sm:$0xf]
      %v410 = vld [vmem:[%s398 + $0x2c] sm:$0xf]
      %v411 = vld [vmem:[%s398 + $0x30] sm:$0xf]
      %v412 = vld [vmem:[%s398 + $0x34] sm:$0xf]
      %v413 = vld [vmem:[%s398 + $0x38] sm:$0xf]
      %v414 = vld [vmem:[%s398 + $0x3c] sm:$0xf]
      %v415 = vpack.c.bf16 %v397, %v397
      %s416 = scalar_lea.vmem %s2, 2
      %v417 = vld [vmem:[%s416] sm:$0x1]
      %v419 = vlaneseq
      %v420 = vshrl.u32 %v419, 7
      %v421 = vsub.s32 0, %v420
      %v422 = vrot.slane %v417, %v421
      %v440 = vunpack.c.l.b16 %v399
      %v441 = vunpack.c.l.b16 %v400
      %v442 = vunpack.c.l.b16 %v401
      %v443 = vunpack.c.l.b16 %v402
      %v444 = vunpack.c.l.b16 %v403
      %v445 = vunpack.c.l.b16 %v404
      %v446 = vunpack.c.l.b16 %v405
      %v447 = vunpack.c.l.b16 %v406
      %v448 = vunpack.c.l.b16 %v407
      %v449 = vunpack.c.l.b16 %v408
      %v450 = vunpack.c.l.b16 %v409
      %v451 = vunpack.c.l.b16 %v410
      %v452 = vunpack.c.l.b16 %v411
      %v453 = vunpack.c.l.b16 %v412
      %v454 = vunpack.c.l.b16 %v413
      %v455 = vunpack.c.l.b16 %v414
      %v456 = vpack.c.b16 %v441, %v440
      %v457 = vpack.c.b16 %v443, %v442
      %v458 = vpack.c.b16 %v445, %v444
      %v459 = vpack.c.b16 %v447, %v446
      %v460 = vpack.c.b16 %v449, %v448
      %v461 = vpack.c.b16 %v451, %v450
      %v462 = vpack.c.b16 %v453, %v452
      %v463 = vpack.c.b16 %v455, %v454
      %472 = vmatprep.subr.bf16.mxu0 0
      %473 = vmatpush1.bf16.msra.mxu0 %v456
      %474 = vmatprep.subr.bf16.mxu0 0
      %475 = vmatpush1.bf16.msra.mxu0 %v457
      %476 = vmatprep.subr.bf16.mxu0 0
      %477 = vmatpush1.bf16.msra.mxu0 %v458
      %478 = vmatprep.subr.bf16.mxu0 0
      %479 = vmatpush1.bf16.msra.mxu0 %v459
      %480 = vmatprep.subr.bf16.mxu0 0
      %481 = vmatpush1.bf16.msra.mxu0 %v460
      %482 = vmatprep.subr.bf16.mxu0 0
      %483 = vmatpush1.bf16.msra.mxu0 %v461
      %484 = vmatprep.subr.bf16.mxu0 0
      %485 = vmatpush1.bf16.msra.mxu0 %v462
      %486 = vmatprep.subr.bf16.mxu0 0
      %487 = vmatpush1.bf16.msra.mxu0 %v463
      %488 = vmatprep.subr.bf16.mxu0 0
      %489 = vmatpush1.bf16.msra.mxu0 0
      %490 = vmatprep.subr.bf16.mxu0 0
      %491 = vmatpush1.bf16.msra.mxu0 0
      %492 = vmatprep.subr.bf16.mxu0 0
      %493 = vmatpush1.bf16.msra.mxu0 0
      %494 = vmatprep.subr.bf16.mxu0 0
      %495 = vmatpush1.bf16.msra.mxu0 0
      %496 = vmatprep.subr.bf16.mxu0 0
      %497 = vmatpush1.bf16.msra.mxu0 0
      %498 = vmatprep.subr.bf16.mxu0 0
      %499 = vmatpush1.bf16.msra.mxu0 0
      %500 = vmatprep.subr.bf16.mxu0 0
      %501 = vmatpush1.bf16.msra.mxu0 0
      %502 = vmatprep.subr.bf16.mxu0 0
      %503 = vmatpush1.bf16.msra.mxu0 0
      %504 = vmatprep.mubr.bf16.mxu0 0
      %505 = vmatmul.mubr.bf16.gmra.mrb[0].mxu0 %v415
      %v506 = vpop.f32.mrb[0].mxu0
      %v507 = vadd.f32 %v422, %v506
      %v508 = vpop.f32.mrb[0].mxu0
      %v509 = vpop.f32.mrb[0].mxu0
      %v510 = vpop.f32.mrb[0].mxu0
      %511 = vdwg.mxu0
      %v512 = vadd.f32 %v507, %v397
      %v513 = vmax.f32 %v512, 0.0
      %s514 = scalar_lea.vmem %s1, 192
      %v515 = vld [vmem:[%s514] sm:$0xf]
      %v516 = vld [vmem:[%s514 + $0x4] sm:$0xf]
      %v517 = vld [vmem:[%s514 + $0x8] sm:$0xf]
      %v518 = vld [vmem:[%s514 + $0xc] sm:$0xf]
      %v519 = vld [vmem:[%s514 + $0x10] sm:$0xf]
      %v520 = vld [vmem:[%s514 + $0x14] sm:$0xf]
      %v521 = vld [vmem:[%s514 + $0x18] sm:$0xf]
      %v522 = vld [vmem:[%s514 + $0x1c] sm:$0xf]
      %v523 = vld [vmem:[%s514 + $0x20] sm:$0xf]
      %v524 = vld [vmem:[%s514 + $0x24] sm:$0xf]
      %v525 = vld [vmem:[%s514 + $0x28] sm:$0xf]
      %v526 = vld [vmem:[%s514 + $0x2c] sm:$0xf]
      %v527 = vld [vmem:[%s514 + $0x30] sm:$0xf]
      %v528 = vld [vmem:[%s514 + $0x34] sm:$0xf]
      %v529 = vld [vmem:[%s514 + $0x38] sm:$0xf]
      %v530 = vld [vmem:[%s514 + $0x3c] sm:$0xf]
      %v531 = vpack.c.bf16 %v513, %v513
      %s532 = scalar_lea.vmem %s2, 3
      %v533 = vld [vmem:[%s532] sm:$0x1]
      %v535 = vlaneseq
      %v536 = vshrl.u32 %v535, 7
      %v537 = vsub.s32 0, %v536
      %v538 = vrot.slane %v533, %v537
      %v556 = vunpack.c.l.b16 %v515
      %v557 = vunpack.c.l.b16 %v516
      %v558 = vunpack.c.l.b16 %v517
      %v559 = vunpack.c.l.b16 %v518
      %v560 = vunpack.c.l.b16 %v519
      %v561 = vunpack.c.l.b16 %v520
      %v562 = vunpack.c.l.b16 %v521
      %v563 = vunpack.c.l.b16 %v522
      %v564 = vunpack.c.l.b16 %v523
      %v565 = vunpack.c.l.b16 %v524
      %v566 = vunpack.c.l.b16 %v525
      %v567 = vunpack.c.l.b16 %v526
      %v568 = vunpack.c.l.b16 %v527
      %v569 = vunpack.c.l.b16 %v528
      %v570 = vunpack.c.l.b16 %v529
      %v571 = vunpack.c.l.b16 %v530
      %v572 = vpack.c.b16 %v557, %v556
      %v573 = vpack.c.b16 %v559, %v558
      %v574 = vpack.c.b16 %v561, %v560
      %v575 = vpack.c.b16 %v563, %v562
      %v576 = vpack.c.b16 %v565, %v564
      %v577 = vpack.c.b16 %v567, %v566
      %v578 = vpack.c.b16 %v569, %v568
      %v579 = vpack.c.b16 %v571, %v570
      %588 = vmatprep.subr.bf16.mxu0 0
      %589 = vmatpush1.bf16.msra.mxu0 %v572
      %590 = vmatprep.subr.bf16.mxu0 0
      %591 = vmatpush1.bf16.msra.mxu0 %v573
      %592 = vmatprep.subr.bf16.mxu0 0
      %593 = vmatpush1.bf16.msra.mxu0 %v574
      %594 = vmatprep.subr.bf16.mxu0 0
      %595 = vmatpush1.bf16.msra.mxu0 %v575
      %596 = vmatprep.subr.bf16.mxu0 0
      %597 = vmatpush1.bf16.msra.mxu0 %v576
      %598 = vmatprep.subr.bf16.mxu0 0
      %599 = vmatpush1.bf16.msra.mxu0 %v577
      %600 = vmatprep.subr.bf16.mxu0 0
      %601 = vmatpush1.bf16.msra.mxu0 %v578
      %602 = vmatprep.subr.bf16.mxu0 0
      %603 = vmatpush1.bf16.msra.mxu0 %v579
      %604 = vmatprep.subr.bf16.mxu0 0
      %605 = vmatpush1.bf16.msra.mxu0 0
      %606 = vmatprep.subr.bf16.mxu0 0
      %607 = vmatpush1.bf16.msra.mxu0 0
      %608 = vmatprep.subr.bf16.mxu0 0
      %609 = vmatpush1.bf16.msra.mxu0 0
      %610 = vmatprep.subr.bf16.mxu0 0
      %611 = vmatpush1.bf16.msra.mxu0 0
      %612 = vmatprep.subr.bf16.mxu0 0
      %613 = vmatpush1.bf16.msra.mxu0 0
      %614 = vmatprep.subr.bf16.mxu0 0
      %615 = vmatpush1.bf16.msra.mxu0 0
      %616 = vmatprep.subr.bf16.mxu0 0
      %617 = vmatpush1.bf16.msra.mxu0 0
      %618 = vmatprep.subr.bf16.mxu0 0
      %619 = vmatpush1.bf16.msra.mxu0 0
      %620 = vmatprep.mubr.bf16.mxu0 0
      %621 = vmatmul.mubr.bf16.gmra.mrb[0].mxu0 %v531
      %v622 = vpop.f32.mrb[0].mxu0
      %v623 = vadd.f32 %v538, %v622
      %v624 = vpop.f32.mrb[0].mxu0
      %v625 = vpop.f32.mrb[0].mxu0
      %v626 = vpop.f32.mrb[0].mxu0
      %627 = vdwg.mxu0
      %628 = vst [vmem:[%s165] sm:$0xff] %v623
      %p629 = scmp.lt.s32.totalorder %s14, 1
      %s630 = scalar_select %p629, %s14, 1
      %s631 = smul.addr %s630, 8
      %s632 = scalar_lea.vmem %s3, %s631
      // Predicated region
      $region33: #{token_decoder.1} parent=31 // pred_check
        %p633 = pneg %p100
      $region34: #{token_decoder.1} parent=31 // pred_check_branch
        %635 = sbr.rel (%p633) target = $region36
      $region35: #{token_decoder.1} parent=31 // pred_region
        _
      $region36: #{token_decoder.1} parent=31 // pred_fallthru
        _
    $region32: #{token_decoder.1} parent=5 // pred_fallthru
      _
    %p636 = scmp.le.s32.totalorder 2, %s9
    // Predicated region
    $region37: #{token_decoder.1} parent=5 // pred_check
      %p637 = pneg %p636
    $region38: #{token_decoder.1} parent=5 // pred_check_branch
      %639 = sbr.rel (%p637) target = $region40
    $region39: #{token_decoder.1} parent=5 // pred_region
      %s640 = ssub.s32 %s9, 2
      // Predicated region
      $region41: #{token_decoder.1} parent=39 // pred_check
        %p641 = pneg %p106
      $region42: #{token_decoder.1} parent=39 // pred_check_branch
        %643 = sbr.rel (%p641) target = $region44
      $region43: #{token_decoder.1} parent=39 // pred_region
        %p644 = scmp.lt.s32.totalorder %s15, 1
        %s645 = scalar_select %p644, %s15, 1
        %s646 = smul.addr %s645, 8
        %s647 = scalar_lea.vmem %s3, %s646
      $region44: #{token_decoder.1} parent=39 // pred_fallthru
        _
    $region40: #{token_decoder.1} parent=5 // pred_fallthru
      _
  $region6: #{token_decoder.1} parent=0 // loop_footer
    %s13 = sadd.s32 1, %s9
  $region7: #{token_decoder.1} parent=0 // loop_footer_branch
    %8 = sbr.rel target = $region3
  $region8: #{token_decoder.1} parent=0 // loop_exit
    _

</llo_original>
